<compile_context>
chip_gen: v7x
topology: tpu7x:2x2x1
jax: 0.10.0
libtpu: 0.0.40
codegen_flags: <defaults>
</compile_context>

<pallas_src>
import jax
import jax.numpy as jnp
from jax import lax
from jax.experimental import pallas as pl
from jax.experimental.pallas import tpu as pltpu


def _erf_kernel(x_ref, o_ref):
    # Elementwise erf on the current VMEM tile; compute in f32 on the VPU/EUP.
    # TODO(synk): evaluate a bf16/EUP-based erf path for bf16 I/O on v6e/v7x
    # (VALU-bound regime at 3.2 TB/s HBM); needs accuracy re-validation vs
    # torch.special.erf before enabling, and must stay f32 on v5e.
    x = x_ref[...]
    o_ref[...] = lax.erf(x.astype(jnp.float32)).astype(o_ref.dtype)


def _pick_tile_target_bytes() -> int:
    """Per-tile buffer target: ~4 MiB on v6e/v7x/etc., ~2 MiB on v5e.

    4 MiB tiles * (2 in + 2 out) pipeline buffers = 16 MiB, which exactly hits
    v5e's 16 MiB scoped-VMEM default, so cap v5e at 2 MiB tiles.
    """
    try:
        kind = (jax.devices()[0].device_kind or "").lower()
    except Exception:  # pragma: no cover - conservative fallback
        kind = ""
    if "v5 lite" in kind or "v5lite" in kind or "v5e" in kind:
        return 2 << 20
    return 4 << 20


def _round_up(a: int, b: int) -> int:
    return -(-a // b) * b


def _erf_2d(x2d: jax.Array) -> jax.Array:
    """Run the Pallas erf kernel on a (rows, lanes) slab, lanes % 128 == 0 (or tiny)."""
    rows, lanes = x2d.shape
    itemsize = jnp.dtype(x2d.dtype).itemsize
    # Native packed-row count per vreg sublane group: 8 f32, 16 bf16, 32 int8.
    sublane = max(8, 32 // itemsize)

    slab_bytes = rows * lanes * itemsize
    tile_target = _pick_tile_target_bytes()
    target_rows = max(sublane, tile_target // (lanes * itemsize))

    if rows <= target_rows:
        # Whole slab fits in one target-sized tile.  Still split into two tiles
        # when the slab is non-trivial so v7x's two TensorCores both get work.
        if slab_bytes > (128 << 10) and rows >= 2 * sublane:
            tile_r = _round_up(pl.cdiv(rows, 2), sublane)
        else:
            tile_r = rows  # single block == full rows dim (always allowed)
    else:
        tile_r = max(sublane, (target_rows // sublane) * sublane)
        # Prefer an even tile count (v7x megacore has 2 TensorCores).
        n_tiles = pl.cdiv(rows, tile_r)
        if n_tiles > 1 and n_tiles % 2 == 1:
            n_tiles += 1
            tile_r = max(sublane, _round_up(pl.cdiv(rows, n_tiles), sublane))

    grid = (pl.cdiv(rows, tile_r),)

    # Explicit scoped-VMEM budget: double-buffered input + output tiles plus
    # headroom for compiler-internal scratch.  Stays well under v7x's 64 MiB.
    tile_bytes = tile_r * lanes * itemsize
    vmem_limit = int(4 * tile_bytes + (8 << 20))

    return pl.pallas_call(
        _erf_kernel,
        out_shape=jax.ShapeDtypeStruct((rows, lanes), x2d.dtype),
        grid=grid,
        in_specs=[pl.BlockSpec((tile_r, lanes), lambda i: (i, 0))],
        out_specs=pl.BlockSpec((tile_r, lanes), lambda i: (i, 0)),
        compiler_params=pltpu.CompilerParams(
            dimension_semantics=("parallel",),
            vmem_limit_bytes=vmem_limit,
        ),
        cost_estimate=pl.CostEstimate(
            # erf lowers to a ~20-op polynomial per element, not a single
            # transcendental.
            flops=20 * rows * lanes,
            transcendentals=0,
            bytes_accessed=2 * rows * lanes * itemsize,
        ),
    )(x2d)


def erf_pallas(x: jax.Array) -> jax.Array:
    """torch.special.erf(x) equivalent, computed in a Pallas TPU kernel."""
    orig_shape = x.shape
    n = x.size
    if n == 0:
        return x

    # Fast path: widest lane width (multiple of 128) dividing n -> lane-dense
    # slab, no padding/slicing copies at all.
    lanes = None
    for cand in (2048, 1024, 512, 256, 128):
        if n % cand == 0:
            lanes = cand
            break

    if lanes is not None:
        out2d = _erf_2d(x.reshape(n // lanes, lanes))
        return out2d.reshape(orig_shape)

    # Ragged fallback (n % 128 != 0): run the 128-aligned bulk through the fast
    # path untouched and only pad/slice the < 128-element tail (negligible
    # traffic), instead of padding and re-slicing the whole array.
    lanes = 128
    flat = x.reshape(-1)
    n_bulk = (n // lanes) * lanes
    tail_len = n - n_bulk

    parts = []
    if n_bulk:
        bulk = _erf_2d(flat[:n_bulk].reshape(n_bulk // lanes, lanes))
        parts.append(bulk.reshape(-1))
    if tail_len:
        tail = jnp.pad(flat[n_bulk:], (0, lanes - tail_len))  # <=127 pad elems
        tail_out = _erf_2d(tail.reshape(1, lanes)).reshape(-1)[:tail_len]
        parts.append(tail_out)

    out = parts[0] if len(parts) == 1 else jnp.concatenate(parts)
    return out.reshape(orig_shape)


if __name__ == "__main__":
    key = jax.random.PRNGKey(0)

    # NCHW input, small shape: batch=2, channels=4, spatial=16x16.
    x = jax.random.normal(key, (2, 4, 16, 16), dtype=jnp.float32)
    y = erf_pallas(x)
    jax.block_until_ready(y)

    y_ref = lax.erf(x)
    assert y.shape == x.shape and y.dtype == x.dtype
    assert jnp.allclose(y, y_ref, atol=1e-6, rtol=1e-6)

    # Extra sanity check for the ragged (n % 128 != 0) fallback path.
    x2 = jax.random.normal(jax.random.PRNGKey(1), (7, 33), dtype=jnp.float32)
    y2 = erf_pallas(x2)
    jax.block_until_ready(y2)
    assert jnp.allclose(y2, lax.erf(x2), atol=1e-6, rtol=1e-6)

    print("KERNEL_OK")
</pallas_src>

<mosaic_0001>
module attributes {stable_mosaic.version = 11 : i64} {
  func.func @_erf_kernel(%arg0: i32, %arg1: memref<1x2048xf32, #tpu.memory_space<vmem>>, %arg2: memref<1x2048xf32, #tpu.memory_space<vmem>>) attributes {dimension_semantics = [#tpu.dimension_semantics<parallel>], iteration_bounds = array<i64: 1>, scalar_prefetch = 0 : i64, scratch_operands = 0 : i64, tpu.core_type = #tpu.core_type<tc>, window_params = [{transform_indices = @transform_0, window_bounds = array<i64: 1, 2048>}, {transform_indices = @transform_1, window_bounds = array<i64: 1, 2048>}]} {
    %c0 = arith.constant 0 : index
    %c0_0 = arith.constant 0 : index
    %0 = vector.load %arg1[%c0, %c0_0] : memref<1x2048xf32, #tpu.memory_space<vmem>>, vector<1x2048xf32>
    %1 = math.erf %0 : vector<1x2048xf32>
    %c0_1 = arith.constant 0 : index
    %c0_2 = arith.constant 0 : index
    %2 = vector.load %arg2[%c0_1, %c0_2] : memref<1x2048xf32, #tpu.memory_space<vmem>>, vector<1x2048xf32>
    tpu.vector_store %arg2[%c0_1, %c0_2], %1 {strides = array<i32>} : memref<1x2048xf32, #tpu.memory_space<vmem>>, vector<1x2048xf32>,
    return
  }
  func.func @transform_0(%arg0: i32) -> (i32, i32) {
    %c0_i32 = arith.constant 0 : i32
    %c0_i32_0 = arith.constant 0 : i32
    return %arg0, %c0_i32 : i32, i32
  }
  func.func @transform_1(%arg0: i32) -> (i32, i32) {
    %c0_i32 = arith.constant 0 : i32
    %c0_i32_0 = arith.constant 0 : i32
    return %arg0, %c0_i32 : i32, i32
  }
}

</mosaic_0001>

<llo_original>
// kernel: tpu_custom_call.1
$region0: #{tpu_custom_call.1}
  #allocation0 [shape = 'u32[]', space=smem, size = 0x4, offset = 0x4, fixed_abs, tag = 'smem constant byte address 0x4 - core index']
  #allocation1 [shape = 'u32[144,128]{1,0:T(1,128)}', space=vmem, size = 0x12000, scoped, tag = 'internal scratch']
  %s0 = inlined_call_operand.hbm [shape: f32[1,2048], index: 0, kind: input, shape index: {}]
  %s1 = inlined_call_operand.hbm [shape: f32[1,2048], index: 1, kind: output, shape index: {}]
  %s2 = sld [smem:[#allocation0]]
  $region18: #{tpu_custom_call.1} parent=0
    _
  %s4 = ssub.s32 1, %s2
  %s5 = scalar_select 0, %s4, %s2
  $region1: #{tpu_custom_call.1} parent=0
    #allocation2 [shape = 'u8[8192]{0}', space=vmem, size = 0x2000, scoped, tag = 'input window, operand 0, single buffered']
    #allocation3 [shape = 's32[1]{0}', space=sflag, size = 0x4, scoped, tag = 'scoped memory for tpu_custom_call.1']
    #allocation4 [shape = 's32[1]{0}', space=sflag, size = 0x4, scoped, tag = 'scoped memory for tpu_custom_call.1']
    #allocation5 [shape = 'u8[8192]{0}', space=vmem, size = 0x2000, scoped, tag = 'output window, operand 0, single buffered']
    %6 = vsyncpa [#allocation3], 0
    %7 = vsyncpa [#allocation4], 0
    // Predicated region
    $region2: #{tpu_custom_call.1} parent=1 // pred_check
      _
    $region3: #{tpu_custom_call.1} parent=1 // pred_check_branch
      %9 = sbr.rel (0) target = $region5
    $region4: #{tpu_custom_call.1} parent=1 // pred_region
      %s11 = ssub.s32 256, 256
      %12 = vsyncadd [#allocation3], %s11
      %s14 = sshll.u32 [#allocation2], 4
      %s15 = int_to_ptr.vmem [resolvable:$true] %s14
      %17 = dma.hbm_to_vmem [thread:$0]  %s0, 256, %s15, [#allocation3]
    $region5: #{tpu_custom_call.1} parent=1 // pred_fallthru
      _
    // Predicated region
    $region6: #{tpu_custom_call.1} parent=1 // pred_check
      _
    $region7: #{tpu_custom_call.1} parent=1 // pred_check_branch
      %19 = sbr.rel (0) target = $region9
    $region8: #{tpu_custom_call.1} parent=1 // pred_region
      %20 = dma.done [#allocation3], 256
    $region9: #{tpu_custom_call.1} parent=1 // pred_fallthru
      _
    %v21 = vld [vmem:[#allocation2] sm:$0xff]
    %v22 = vld [vmem:[#allocation2 + $0x8] sm:$0xff]
    %v23 = verf.f32.pop %v21
    %v24 = verf.f32.pop %v22
    %25 = vst [vmem:[#allocation5] sm:$0xff] %v23
    %26 = vst [vmem:[#allocation5 + $0x8] sm:$0xff] %v24
    // Predicated region
    $region10: #{tpu_custom_call.1} parent=1 // pred_check
      _
    $region11: #{tpu_custom_call.1} parent=1 // pred_check_branch
      %28 = sbr.rel (0) target = $region13
    $region12: #{tpu_custom_call.1} parent=1 // pred_region
      %s30 = ssub.s32 256, 256
      %31 = vsyncadd [#allocation4], %s30
      %s33 = sshll.u32 [#allocation5], 4
      %s34 = int_to_ptr.vmem [resolvable:$true] %s33
      %36 = dma.vmem_to_hbm [thread:$0]  %s34, 256, %s1, [#allocation4]
    $region13: #{tpu_custom_call.1} parent=1 // pred_fallthru
      _
    // Predicated region
    $region14: #{tpu_custom_call.1} parent=1 // pred_check
      _
    $region15: #{tpu_custom_call.1} parent=1 // pred_check_branch
      %38 = sbr.rel (0) target = $region17
    $region16: #{tpu_custom_call.1} parent=1 // pred_region
      %39 = dma.done [#allocation4], 256
    $region17: #{tpu_custom_call.1} parent=1 // pred_fallthru
      _
    %40 = vsyncpa [#allocation3], 1
    %41 = vsyncpa [#allocation4], 1

</llo_original>
